<compile_context>
chip_gen: v5e
topology: v5e:2x2
jax: 0.10.0
libtpu: 0.0.40
codegen_flags: <defaults>
</compile_context>

<pallas_src>
import math

import jax
import jax.numpy as jnp
from jax import lax
from jax.experimental import pallas as pl
from jax.experimental.pallas import tpu as pltpu


# ------------------------------ kernels --------------------------------------


def _make_avg_kernel(T, tT, nt):
    """Mean over the chunked T axis with an f32 VMEM accumulator."""
    ragged = (T % tT) != 0
    valid_last = T - (nt - 1) * tT
    inv_t = 1.0 / T
    last = nt - 1

    def kernel(x_ref, o_ref, acc_ref):
        k = pl.program_id(2)

        @pl.when(k == 0)
        def _():
            acc_ref[...] = jnp.zeros_like(acc_ref)

        if ragged:
            @pl.when(k != last)
            def _():
                acc_ref[...] += jnp.sum(x_ref[...], axis=1, dtype=jnp.float32)

            @pl.when(k == last)
            def _():
                acc_ref[...] += jnp.sum(x_ref[:, :valid_last, :], axis=1,
                                        dtype=jnp.float32)
        else:
            acc_ref[...] += jnp.sum(x_ref[...], axis=1, dtype=jnp.float32)

        @pl.when(k == last)
        def _():
            o_ref[...] = (acc_ref[...] * inv_t).astype(o_ref.dtype)

    return kernel


def _make_max_kernel(T, tT, nt, in_dtype):
    """Max + first-occurrence argmax over the chunked T axis."""
    ragged = (T % tT) != 0
    valid_last = T - (nt - 1) * tT
    last = nt - 1
    if jnp.issubdtype(jnp.dtype(in_dtype), jnp.floating):
        init_val = float("-inf")
    else:
        init_val = int(jnp.iinfo(in_dtype).min)

    def kernel(x_ref, val_ref, idx_ref, vmax_ref, vidx_ref):
        k = pl.program_id(2)

        @pl.when(k == 0)
        def _():
            vmax_ref[...] = jnp.full(vmax_ref.shape, init_val, vmax_ref.dtype)
            vidx_ref[...] = jnp.zeros(vidx_ref.shape, jnp.int32)

        def merge(rows):
            # Per-chunk vectorized reduce (max + first index of the max), then
            # merge into the running (vmax, vidx) state.  NOTE: jnp.argmax
            # (variadic reduce) is not lowered by Mosaic, hence the eq+min trick.
            xs = x_ref[:, :rows, :]                              # (tb, rows, tf)
            cmax = jnp.max(xs, axis=1)                           # (tb, tf)
            ids = lax.broadcasted_iota(jnp.int32, xs.shape, 1)
            cidx = jnp.min(jnp.where(xs == cmax[:, None, :], ids, rows), axis=1)
            gidx = k * tT + cidx                                 # global T index
            pred = cmax > vmax_ref[...]                          # strict > keeps
            vidx_ref[...] = jnp.where(pred, gidx, vidx_ref[...])  # first occurrence
            vmax_ref[...] = jnp.where(pred, cmax, vmax_ref[...])

        if ragged:
            @pl.when(k != last)
            def _():
                merge(tT)

            @pl.when(k == last)
            def _():
                merge(valid_last)
        else:
            merge(tT)

        @pl.when(k == last)
        def _():
            val_ref[...] = vmax_ref[...].astype(val_ref.dtype)
            idx_ref[...] = vidx_ref[...]

    return kernel


# --------------------------- tile selection -----------------------------------


def _cdiv(a, b):
    return -(-a // b)


def _choose_tiles(b_pre, T, f_post, itemsize, budget_elems):
    """Pick (tb, tf, tT) so each block is large (HBM roofline) but VMEM-safe."""
    packing = max(1, 4 // itemsize)
    sub = 8 * packing

    # Lane tile: large multiple of 128 (ragged edge via cdiv), or full F if small.
    if f_post <= 128:
        tf = f_post
    else:
        tf = min(2048, (f_post // 128) * 128)

    # Batch tile (output sublane dim): full B if small, else a multiple of
    # 8*packing; grow while a full-T block still fits the budget and the
    # parallel axes keep >= 4 blocks (megacore / v7x sharding).
    if b_pre <= sub:
        tb = b_pre
    else:
        tb = sub
        while (tb * 2 * T * tf <= budget_elems
               and _cdiv(b_pre, tb * 2) * _cdiv(f_post, tf) >= 4
               and tb * 2 <= 64 * packing):
            tb *= 2

    # Make sure v7x's 2 TensorCores both get work: if the parallel axes have a
    # single block, halve tf (or tb) once.
    if _cdiv(b_pre, tb) * _cdiv(f_post, tf) < 2:
        if tf > 128:
            tf = max(128, ((tf // 2) // 128) * 128)
        elif tb > sub:
            tb = max(sub, ((tb // 2) // sub) * sub)

    # Temporal (reduction) tile: whole T if the block fits the budget, else the
    # largest multiple of 8*packing that does (layout: middle dim % 8 == 0).
    if tb * T * tf <= budget_elems:
        tT = T
    else:
        tT = max(sub, (budget_elems // (tb * tf) // sub) * sub)
        tT = min(tT, T)

    return tb, tf, tT


# ------------------------------ wrapper ---------------------------------------


def temporal_aggregate(x, pooling="avg", model_type="2D"):
    """Pallas implementation of TemporalAggreModel.forward."""
    if model_type == "2D":
        dim = 1
    elif model_type == "3D":
        dim = 2
    else:
        raise ValueError(model_type)

    if pooling not in ("avg", "max"):
        # TODO(synk): the 'lstm' branch references undefined (m, n, h) in the
        # source module and is not implementable; only 'avg'/'max' supported.
        raise NotImplementedError("pooling='lstm' is not supported")

    shape = x.shape
    T = int(shape[dim])
    b_pre = int(math.prod(shape[:dim]))
    f_post = int(math.prod(shape[dim + 1:]))
    out_nd_shape = shape[:dim] + shape[dim + 1:]

    x3 = x.reshape(b_pre, T, f_post)
    itemsize = jnp.dtype(x.dtype).itemsize

    # Element budgets per input block (conservative: leave room for the f32
    # widening in 'avg' and the chunk-sized int32 iota/where temps in 'max').
    budget_elems = (3 << 20) if pooling == "avg" else (1 << 20)

    tb, tf, tT = _choose_tiles(b_pre, T, f_post, itemsize, budget_elems)
    nb, nf, nt = _cdiv(b_pre, tb), _cdiv(f_post, tf), _cdiv(T, tT)
    grid = (nb, nf, nt)

    in_spec = pl.BlockSpec((tb, tT, tf), lambda b, f, k: (b, k, f))
    out_spec = pl.BlockSpec((tb, tf), lambda b, f, k: (b, f))

    # VMEM accounting: double-buffered in/out blocks + scratch + compute temps.
    in_blk = tb * tT * tf
    out_blk = tb * tf
    if pooling == "avg":
        temp_bytes = in_blk * (4 if itemsize < 4 else 0)   # possible f32 widen
        out_bytes = out_blk * itemsize
        scratch_bytes = out_blk * 4
    else:
        temp_bytes = in_blk * 12                           # iota + where + masks
        out_bytes = out_blk * (itemsize + 4)
        scratch_bytes = out_blk * (itemsize + 4)
    need = 2 * in_blk * itemsize + 2 * out_bytes + scratch_bytes + temp_bytes
    vmem_limit = int(min(max(need + (4 << 20), 32 << 20), 48 << 20))

    cparams = pltpu.CompilerParams(
        dimension_semantics=("parallel", "parallel", "arbitrary"),
        vmem_limit_bytes=vmem_limit,
    )

    n_in = b_pre * T * f_post
    n_out = b_pre * f_post
    cost = pl.CostEstimate(
        flops=n_in * (1 if pooling == "avg" else 3),
        transcendentals=0,
        bytes_accessed=n_in * itemsize
        + n_out * (itemsize + (0 if pooling == "avg" else 4)),
    )

    if pooling == "avg":
        y = pl.pallas_call(
            _make_avg_kernel(T, tT, nt),
            out_shape=jax.ShapeDtypeStruct((b_pre, f_post), x.dtype),
            grid=grid,
            in_specs=[in_spec],
            out_specs=out_spec,
            scratch_shapes=[pltpu.VMEM((tb, tf), jnp.float32)],
            compiler_params=cparams,
            cost_estimate=cost,
        )(x3)
        return y.reshape(out_nd_shape)

    vals, idxs = pl.pallas_call(
        _make_max_kernel(T, tT, nt, x.dtype),
        out_shape=(
            jax.ShapeDtypeStruct((b_pre, f_post), x.dtype),
            jax.ShapeDtypeStruct((b_pre, f_post), jnp.int32),
        ),
        grid=grid,
        in_specs=[in_spec],
        out_specs=(out_spec, out_spec),
        scratch_shapes=[pltpu.VMEM((tb, tf), x.dtype),
                        pltpu.VMEM((tb, tf), jnp.int32)],
        compiler_params=cparams,
        cost_estimate=cost,
    )(x3)
    # torch.max(x, dim) returns (values, indices)
    return vals.reshape(out_nd_shape), idxs.reshape(out_nd_shape)


# -------------------------------- main ----------------------------------------


if __name__ == "__main__":
    key = jax.random.PRNGKey(0)
    k1, k2, k3 = jax.random.split(key, 3)

    # '2D' model: (N, T, C, H, W), reduce dim=1
    x = jax.random.normal(k1, (2, 8, 4, 16, 16), dtype=jnp.float32)

    y = temporal_aggregate(x, pooling="avg", model_type="2D")
    y = jax.block_until_ready(y)
    assert y.shape == (2, 4, 16, 16)
    assert jnp.allclose(y, jnp.mean(x, axis=1), atol=1e-5, rtol=1e-5)

    mv, mi = temporal_aggregate(x, pooling="max", model_type="2D")
    jax.block_until_ready((mv, mi))
    assert jnp.allclose(mv, jnp.max(x, axis=1), atol=1e-6)
    assert jnp.array_equal(mi, jnp.argmax(x, axis=1).astype(jnp.int32))

    # '3D' model: (N, C, T, H, W), reduce dim=2
    x3d = jax.random.normal(k2, (2, 4, 8, 16, 16), dtype=jnp.float32)
    y3d = jax.block_until_ready(
        temporal_aggregate(x3d, pooling="avg", model_type="3D"))
    assert y3d.shape == (2, 4, 16, 16)
    assert jnp.allclose(y3d, jnp.mean(x3d, axis=2), atol=1e-5, rtol=1e-5)

    # Long-T case: exercises the chunked-T reduction axis (ragged last chunk).
    xl = jax.random.normal(k3, (2, 2000, 2048), dtype=jnp.float32)
    yl = jax.block_until_ready(
        temporal_aggregate(xl, pooling="avg", model_type="2D"))
    assert jnp.allclose(yl, jnp.mean(xl, axis=1), atol=1e-4, rtol=1e-4)
    lv, li = temporal_aggregate(xl, pooling="max", model_type="2D")
    jax.block_until_ready((lv, li))
    assert jnp.allclose(lv, jnp.max(xl, axis=1), atol=1e-6)
    assert jnp.array_equal(li, jnp.argmax(xl, axis=1).astype(jnp.int32))

    print("KERNEL_OK")
</pallas_src>

<mosaic_0001>
module attributes {stable_mosaic.version = 11 : i64} {
  func.func @kernel(%arg0: i32, %arg1: i32, %arg2: i32, %arg3: memref<2x8x512xf32, #tpu.memory_space<vmem>>, %arg4: memref<2x512xf32, #tpu.memory_space<vmem>>, %arg5: memref<2x512xf32, #tpu.memory_space<vmem>>) attributes {dimension_semantics = [#tpu.dimension_semantics<parallel>, #tpu.dimension_semantics<parallel>, #tpu.dimension_semantics<arbitrary>], iteration_bounds = array<i64: 1, 2, 1>, scalar_prefetch = 0 : i64, scratch_operands = 1 : i64, tpu.core_type = #tpu.core_type<tc>, window_params = [{transform_indices = @transform_0, window_bounds = array<i64: 2, 8, 512>}, {transform_indices = @transform_1, window_bounds = array<i64: 2, 512>}]} {
    %c0_i32 = arith.constant 0 : i32
    %0 = arith.cmpi eq, %arg2, %c0_i32 : i32
    %1 = arith.extui %0 : i1 to i32
    %c0_i32_0 = arith.constant 0 : i32
    %2 = arith.cmpi ne, %1, %c0_i32_0 : i32
    scf.if %2 {
      %cst_9 = arith.constant 0.000000e+00 : f32
      %11 = vector.broadcast %cst_9 : f32 to vector<2x512xf32>
      %c0_10 = arith.constant 0 : index
      %c0_11 = arith.constant 0 : index
      %12 = vector.load %arg5[%c0_10, %c0_11] : memref<2x512xf32, #tpu.memory_space<vmem>>, vector<2x512xf32>
      tpu.vector_store %arg5[%c0_10, %c0_11], %11 {strides = array<i32>} : memref<2x512xf32, #tpu.memory_space<vmem>>, vector<2x512xf32>,
    } else {
    }
    %c0 = arith.constant 0 : index
    %c0_1 = arith.constant 0 : index
    %3 = vector.load %arg5[%c0, %c0_1] : memref<2x512xf32, #tpu.memory_space<vmem>>, vector<2x512xf32>
    %c0_2 = arith.constant 0 : index
    %c0_3 = arith.constant 0 : index
    %c0_4 = arith.constant 0 : index
    %4 = vector.load %arg3[%c0_2, %c0_3, %c0_4] : memref<2x8x512xf32, #tpu.memory_space<vmem>>, vector<2x8x512xf32>
    %cst = arith.constant dense<0.000000e+00> : vector<2x512xf32>
    %5 = vector.multi_reduction <add>, %4, %cst [1] : vector<2x8x512xf32> to vector<2x512xf32>
    %6 = arith.addf %3, %5 : vector<2x512xf32>
    %c0_5 = arith.constant 0 : index
    %c0_6 = arith.constant 0 : index
    %7 = vector.load %arg5[%c0_5, %c0_6] : memref<2x512xf32, #tpu.memory_space<vmem>>, vector<2x512xf32>
    tpu.vector_store %arg5[%c0_5, %c0_6], %6 {strides = array<i32>} : memref<2x512xf32, #tpu.memory_space<vmem>>, vector<2x512xf32>,
    %c0_i32_7 = arith.constant 0 : i32
    %8 = arith.cmpi eq, %arg2, %c0_i32_7 : i32
    %9 = arith.extui %8 : i1 to i32
    %c0_i32_8 = arith.constant 0 : i32
    %10 = arith.cmpi ne, %9, %c0_i32_8 : i32
    scf.if %10 {
      %c0_9 = arith.constant 0 : index
      %c0_10 = arith.constant 0 : index
      %11 = vector.load %arg5[%c0_9, %c0_10] : memref<2x512xf32, #tpu.memory_space<vmem>>, vector<2x512xf32>
      %cst_11 = arith.constant 1.250000e-01 : f32
      %12 = vector.broadcast %cst_11 : f32 to vector<2x512xf32>
      %13 = arith.mulf %11, %12 : vector<2x512xf32>
      %c0_12 = arith.constant 0 : index
      %c0_13 = arith.constant 0 : index
      %14 = vector.load %arg4[%c0_12, %c0_13] : memref<2x512xf32, #tpu.memory_space<vmem>>, vector<2x512xf32>
      tpu.vector_store %arg4[%c0_12, %c0_13], %13 {strides = array<i32>} : memref<2x512xf32, #tpu.memory_space<vmem>>, vector<2x512xf32>,
    } else {
    }
    return
  }
  func.func @transform_0(%arg0: i32, %arg1: i32, %arg2: i32) -> (i32, i32, i32) {
    %c0_i32 = arith.constant 0 : i32
    return %arg0, %arg2, %arg1 : i32, i32, i32
  }
  func.func @transform_1(%arg0: i32, %arg1: i32, %arg2: i32) -> (i32, i32) {
    %c0_i32 = arith.constant 0 : i32
    return %arg0, %arg1 : i32, i32
  }
}

</mosaic_0001>

<llo_original>
// kernel: tpu_custom_call.1
$region0: #{tpu_custom_call.1}
  #allocation0 [shape = 'u32[]', space=smem, size = 0x4, offset = 0x4, fixed_abs, tag = 'smem constant byte address 0x4 - core index']
  #allocation1 [shape = 'u32[72,128]{1,0:T(1,128)}', space=vmem, size = 0x9000, scoped, tag = 'internal scratch']
  #allocation2 [shape = 'f32[2,512]{1,0:T(2,128)}', space=vmem, size = 0x1000, scoped, tag = 'scratch operand']
  %s0 = inlined_call_operand.hbm [shape: f32[2,8,1024], index: 0, kind: input, shape index: {}]
  %s1 = inlined_call_operand.hbm [shape: f32[2,1024], index: 1, kind: output, shape index: {}]
  %s2 = sld [smem:[#allocation0]]
  $region49: #{tpu_custom_call.1} parent=0
    _
  %s4 = ssub.s32 1, %s2
  %s5 = scalar_select 0, %s4, %s2
  $region1: #{tpu_custom_call.1} parent=0
    #allocation3 [shape = 'u8[65536]{0}', space=vmem, size = 0x10000, scoped, tag = 'input window, operand 0']
    #allocation4 [shape = 's32[2]{0}', space=sflag, size = 0x8, scoped, tag = 'scoped memory for tpu_custom_call.1']
    #allocation5 [shape = 's32[2]{0}', space=sflag, size = 0x8, scoped, tag = 'scoped memory for tpu_custom_call.1']
    #allocation6 [shape = 'u8[8192]{0}', space=vmem, size = 0x2000, scoped, tag = 'output window, operand 0']
    %6 = vsyncpa [#allocation4], 0
    %s7 = scalar_lea.sflag [#allocation4], 1
    %8 = vsyncpa %s7, 0
    %9 = vsyncpa [#allocation5], 0
    %s10 = scalar_lea.sflag [#allocation5], 1
    %11 = vsyncpa %s10, 0
    loop: start=0, step=1, limit=4
    $region2: #{tpu_custom_call.1} parent=1 // loop_pre_header
      _
    $region3: #{tpu_custom_call.1} parent=1 // loop_header
      %s13 = sphi 0, %s17
      %p14 = scmp.ge.s32.totalorder %s13, 4
      %s20 = sphi 0, %s39
      %s21 = sphi 0, %s35
      %s22 = sphi 0, %s31
      %s23 = sphi 0, %s20
      %s24 = sphi 0, %s21
      %s25 = sphi 0, %s22
      %s26 = sphi 0, %s23
      %s27 = sphi 0, %s24
      %s28 = sphi 0, %s25
      %s46 = sphi 0, %s48
      %s49 = sphi 0, %s46
      %s50 = sphi 0, %s49
      %s66 = sphi 0, %s50
      %s74 = sphi 0, %s76
      %s77 = sphi 0, %s74
      %s78 = sphi 0, %s77
      %s94 = sphi 0, %s78
    $region4: #{tpu_custom_call.1} parent=1 // loop_header_branch
      %16 = sbr.rel (%p14) target = $region8
    $region5: #{tpu_custom_call.1} parent=1 // loop_body
      %s18 = ssub.s32 %s13, 1
      %s19 = ssub.s32 %s13, 2
      %s29 = sadd.s32 1, %s22
      %p30 = scmp.ge.s32.totalorder %s29, 1
      %s31 = scalar_select %p30, 0, %s29
      %s32 = sadd.s32 1, %s21
      %s33 = scalar_select %p30, %s32, %s21
      %p34 = scmp.ge.s32.totalorder %s33, 2
      %s35 = scalar_select %p34, 0, %s33
      %s36 = sadd.s32 1, %s20
      %s37 = scalar_select %p34, %s36, %s20
      %p38 = scmp.ge.s32.totalorder %s37, 1
      %s39 = scalar_select %p38, 0, %s37
      %s40 = ssub.s32 %s20, %s39
      %s41 = ssub.s32 %s22, %s31
      %s42 = sor.u32 %s40, %s41
      %s43 = ssub.s32 %s21, %s35
      %s44 = sor.u32 %s42, %s43
      %p45 = scmp.eq.s32.totalorder %s44, 0
      %s47 = sadd.s32 %s46, 1
      %s48 = scalar_select %p45, %s46, %s47
      %p51 = pneg %p45
      %p52 = scmp.eq.s32.totalorder %s13, 1
      %p53 = por %p51, %p52
      %p54 = scmp.ne.s32.totalorder %s46, %s49
      %p55 = scmp.eq.s32.totalorder %s13, 0
      %p56 = por %p54, %p55
      %p57 = scmp.ne.s32.totalorder %s46, %s49
      %p58 = scmp.eq.s32.totalorder %s18, 1
      %p59 = por %p57, %p58
      %p60 = scmp.ne.s32.totalorder %s49, %s50
      %p61 = scmp.eq.s32.totalorder %s18, 0
      %p62 = por %p60, %p61
      %p63 = scmp.ne.s32.totalorder %s49, %s50
      %p64 = scmp.eq.s32.totalorder %s19, 1
      %p65 = por %p63, %p64
      %p67 = scmp.ne.s32.totalorder %s50, %s66
      %p68 = scmp.eq.s32.totalorder %s19, 0
      %p69 = por %p67, %p68
      %s70 = ssub.s32 %s20, %s39
      %s71 = ssub.s32 %s21, %s35
      %s72 = sor.u32 %s70, %s71
      %p73 = scmp.eq.s32.totalorder %s72, 0
      %s75 = sadd.s32 %s74, 1
      %s76 = scalar_select %p73, %s74, %s75
      %p79 = pneg %p73
      %p80 = scmp.eq.s32.totalorder %s13, 1
      %p81 = por %p79, %p80
      %p82 = scmp.ne.s32.totalorder %s74, %s77
      %p83 = scmp.eq.s32.totalorder %s13, 0
      %p84 = por %p82, %p83
      %p85 = scmp.ne.s32.totalorder %s74, %s77
      %p86 = scmp.eq.s32.totalorder %s18, 1
      %p87 = por %p85, %p86
      %p88 = scmp.ne.s32.totalorder %s77, %s78
      %p89 = scmp.eq.s32.totalorder %s18, 0
      %p90 = por %p88, %p89
      %p91 = scmp.ne.s32.totalorder %s77, %s78
      %p92 = scmp.eq.s32.totalorder %s19, 1
      %p93 = por %p91, %p92
      %p95 = scmp.ne.s32.totalorder %s78, %s94
      %p96 = scmp.eq.s32.totalorder %s19, 0
      %p97 = por %p95, %p96
      %p98 = scmp.le.s32.totalorder 1, %s13
      %p99 = scmp.lt.s32.totalorder %s13, 3
      %p100 = pnand %p98, %p99
      %p101 = pneg %p100
      // Predicated region
      $region9: #{tpu_custom_call.1} parent=5 // pred_check
        _
      $region10: #{tpu_custom_call.1} parent=5 // pred_check_branch
        %103 = sbr.rel (%p100) target = $region12
      $region11: #{tpu_custom_call.1} parent=5 // pred_region
        %s104 = ssub.s32 %s13, 1
      $region12: #{tpu_custom_call.1} parent=5 // pred_fallthru
        _
      %p105 = scmp.lt.s32.totalorder %s13, 2
      // Predicated region
      $region13: #{tpu_custom_call.1} parent=5 // pred_check
        %p106 = pneg %p105
      $region14: #{tpu_custom_call.1} parent=5 // pred_check_branch
        %108 = sbr.rel (%p106) target = $region16
      $region15: #{tpu_custom_call.1} parent=5 // pred_region
        // Predicated region
        $region17: #{tpu_custom_call.1} parent=15 // pred_check
          %p109 = pneg %p56
        $region18: #{tpu_custom_call.1} parent=15 // pred_check_branch
          %111 = sbr.rel (%p109) target = $region20
        $region19: #{tpu_custom_call.1} parent=15 // pred_region
          %s112 = sand.u32 %s46, 1
          %s113 = scalar_lea.sflag [#allocation4], %s112
          %s114 = sand.u32 %s46, 1
          %s115 = smul.addr %s114, 64
          %s116 = scalar_lea.vmem [#allocation3], %s115
          %s117 = smul.u32 2, %s20
          %s118 = smul.u32 4, %s21
          %120 = vsyncadd %s113, 0
          %s121 = smul.addr %s22, 8
          %s122 = sadd.s32 %s118, %s121
          %s123 = smul.addr %s117, 8
          %s124 = sadd.s32 %s122, %s123
          %s125 = smul.addr %s124, 8
          %s126 = scalar_lea.hbm %s0, %s125
          %s127 = sshll.u32 %s126, 4
          %s128 = int_to_ptr.hbm [resolvable:$true] %s127
          %s129 = sshll.u32 %s116, 4
          %s130 = int_to_ptr.vmem [resolvable:$true] %s129
          %135 = dma.hbm_to_vmem [thread:$0]  %s128, 1024, %s130, %s113, 1024, 512, 32
        $region20: #{tpu_custom_call.1} parent=15 // pred_fallthru
          _
      $region16: #{tpu_custom_call.1} parent=5 // pred_fallthru
        _
      %p136 = scmp.le.s32.totalorder 1, %s13
      %p137 = scmp.lt.s32.totalorder %s13, 3
      %p138 = pnand %p136, %p137
      %p139 = pneg %p138
      // Predicated region
      $region21: #{tpu_custom_call.1} parent=5 // pred_check
        _
      $region22: #{tpu_custom_call.1} parent=5 // pred_check_branch
        %141 = sbr.rel (%p138) target = $region24
      $region23: #{tpu_custom_call.1} parent=5 // pred_region
        %s142 = ssub.s32 %s13, 1
        %s143 = sand.u32 %s49, 1
        %s144 = scalar_lea.sflag [#allocation4], %s143
        %s145 = sand.u32 %s49, 1
        %s146 = smul.addr %s145, 64
        %s147 = scalar_lea.vmem [#allocation3], %s146
        // Predicated region
        $region25: #{tpu_custom_call.1} parent=23 // pred_check
          %p148 = pneg %p62
        $region26: #{tpu_custom_call.1} parent=23 // pred_check_branch
          %150 = sbr.rel (%p148) target = $region28
        $region27: #{tpu_custom_call.1} parent=23 // pred_region
          %152 = dma.done %s144, 1024
        $region28: #{tpu_custom_call.1} parent=23 // pred_fallthru
          _
        %s153 = sand.u32 %s49, 1
        %s154 = scalar_lea.sflag [#allocation4], %s153
        %s155 = sand.u32 %s49, 1
        %s156 = smul.addr %s155, 64
        %s157 = scalar_lea.vmem [#allocation3], %s156
        %p158 = pneg %p62
        %p159 = pneg %p59
        %p160 = pneg %p90
        %p161 = pneg %p87
        %s162 = sand.u32 %s77, 1
        %s163 = scalar_lea.sflag [#allocation5], %s162
        %s164 = sand.u32 %s77, 1
        %s165 = smul.addr %s164, 8
        %s166 = scalar_lea.vmem [#allocation6], %s165
        %s167 = smul.u32 2, %s23
        %s168 = smul.u32 4, %s24
        %s169 = smul.u32 4, %s24
        %p170 = scmp.eq.s32.totalorder %s25, 0
        // Predicated region
        $region29: #{tpu_custom_call.1} parent=23 // pred_check
          %p171 = pneg %p170
        $region30: #{tpu_custom_call.1} parent=23 // pred_check_branch
          %173 = sbr.rel (%p171) target = $region32
        $region31: #{tpu_custom_call.1} parent=23 // pred_region
          %174 = vst [vmem:[#allocation2] sm:$0xff] 0.0
        $region32: #{tpu_custom_call.1} parent=23 // pred_fallthru
          _
        %v175 = vld [vmem:[#allocation2] sm:$0xff]
        %v176 = vld [vmem:[%s147] sm:$0xff]
        %v177 = vld [vmem:[%s147 + $0x8] sm:$0xff]
        %v178 = vld [vmem:[%s147 + $0x10] sm:$0xff]
        %v179 = vld [vmem:[%s147 + $0x18] sm:$0xff]
        %v180 = vld [vmem:[%s147 + $0x20] sm:$0xff]
        %v181 = vld [vmem:[%s147 + $0x28] sm:$0xff]
        %v182 = vld [vmem:[%s147 + $0x30] sm:$0xff]
        %v183 = vld [vmem:[%s147 + $0x38] sm:$0xff]
        %v184 = vrot.slane %v176, 4
        %v185 = vadd.f32 %v176, %v184
        %v186 = vrot.slane %v185, 2
        %v187 = vadd.f32 %v185, %v186
        %v188 = vrot.slane %v187, 1
        %v189 = vadd.f32 %v187, %v188
        %v190 = vrot.slane %v177, 4
        %v191 = vadd.f32 %v177, %v190
        %v192 = vrot.slane %v191, 2
        %v193 = vadd.f32 %v191, %v192
        %v194 = vrot.slane %v193, 1
        %v195 = vadd.f32 %v193, %v194
        %v196 = vrot.slane %v178, 4
        %v197 = vadd.f32 %v178, %v196
        %v198 = vrot.slane %v197, 2
        %v199 = vadd.f32 %v197, %v198
        %v200 = vrot.slane %v199, 1
        %v201 = vadd.f32 %v199, %v200
        %v202 = vrot.slane %v179, 4
        %v203 = vadd.f32 %v179, %v202
        %v204 = vrot.slane %v203, 2
        %v205 = vadd.f32 %v203, %v204
        %v206 = vrot.slane %v205, 1
        %v207 = vadd.f32 %v205, %v206
        %v208 = vrot.slane %v180, 4
        %v209 = vadd.f32 %v180, %v208
        %v210 = vrot.slane %v209, 2
        %v211 = vadd.f32 %v209, %v210
        %v212 = vrot.slane %v211, 1
        %v213 = vadd.f32 %v211, %v212
        %v214 = vrot.slane %v181, 4
        %v215 = vadd.f32 %v181, %v214
        %v216 = vrot.slane %v215, 2
        %v217 = vadd.f32 %v215, %v216
        %v218 = vrot.slane %v217, 1
        %v219 = vadd.f32 %v217, %v218
        %v220 = vrot.slane %v182, 4
        %v221 = vadd.f32 %v182, %v220
        %v222 = vrot.slane %v221, 2
        %v223 = vadd.f32 %v221, %v222
        %v224 = vrot.slane %v223, 1
        %v225 = vadd.f32 %v223, %v224
        %v226 = vrot.slane %v183, 4
        %v227 = vadd.f32 %v183, %v226
        %v228 = vrot.slane %v227, 2
        %v229 = vadd.f32 %v227, %v228
        %v230 = vrot.slane %v229, 1
        %v231 = vadd.f32 %v229, %v230
        %v240 = vrot.slane %v195, 6
        %v241 = vrot.slane %v201, 4
        %v242 = vrot.slane %v207, 2
        %v243 = vrot.slane %v219, 6
        %v244 = vrot.slane %v225, 4
        %v245 = vrot.slane %v231, 2
        %vm246 = vcmask 1041408
        %v247 = vsel %vm246, %v189, %v240
        %vm248 = vcmask 1045508
        %v249 = vsel %vm248, %v241, %v242
        %vm250 = vcmask 1043456
        %v251 = vsel %vm250, %v247, %v249
        %v252 = vsel %vm246, %v213, %v243
        %v253 = vsel %vm248, %v244, %v245
        %v254 = vsel %vm250, %v252, %v253
        %vm255 = vcmask 1044484
        %v256 = vsel %vm255, %v251, %v251
        %vm257 = vcmask 1046534
        %v258 = vsel %vm257, %v251, %v256
        %v259 = vrot.slane %v254, 7
        %vm260 = vcmask 1041409
        %v261 = vsel %vm260, %v259, %v258
        %vm262 = vcmask 1043459
        %v263 = vsel %vm262, %v259, %v261
        %vm264 = vcmask 1045509
        %v265 = vsel %vm264, %v259, %v263
        %vm266 = vcmask 1047559
        %v267 = vsel %vm266, %v259, %v265
        %v269 = vadd.f32 %v175, %v267
        %270 = vst [vmem:[#allocation2] sm:$0xff] %v269
        // Predicated region
        $region33: #{tpu_custom_call.1} parent=23 // pred_check
          %p271 = pneg %p170
        $region34: #{tpu_custom_call.1} parent=23 // pred_check_branch
          %273 = sbr.rel (%p271) target = $region36
        $region35: #{tpu_custom_call.1} parent=23 // pred_region
          %v274 = vld [vmem:[#allocation2] sm:$0xff]
          %v275 = vmul.f32 %v274, 0.125
          %276 = vst [vmem:[%s166] sm:$0xff] %v275
        $region36: #{tpu_custom_call.1} parent=23 // pred_fallthru
          _
        %s277 = sand.u32 %s77, 1
        %s278 = scalar_lea.sflag [#allocation5], %s277
        %s279 = sand.u32 %s77, 1
        %s280 = smul.addr %s279, 8
        %s281 = scalar_lea.vmem [#allocation6], %s280
        // Predicated region
        $region37: #{tpu_custom_call.1} parent=23 // pred_check
          %p282 = pneg %p87
        $region38: #{tpu_custom_call.1} parent=23 // pred_check_branch
          %284 = sbr.rel (%p282) target = $region40
        $region39: #{tpu_custom_call.1} parent=23 // pred_region
          %s285 = smul.u32 4, %s24
          %287 = vsyncadd %s278, 0
          %s288 = smul.addr %s23, 8
          %s289 = sadd.s32 %s285, %s288
          %s290 = smul.addr %s289, 2
          %s291 = scalar_lea.hbm %s1, %s290
          %s293 = sshll.u32 %s281, 4
          %s294 = int_to_ptr.vmem [resolvable:$true] %s293
          %s295 = sshll.u32 %s291, 4
          %s296 = int_to_ptr.hbm [resolvable:$true] %s295
          %298 = dma.vmem_to_hbm [thread:$0]  %s294, 128, %s296, %s278
        $region40: #{tpu_custom_call.1} parent=23 // pred_fallthru
          _
      $region24: #{tpu_custom_call.1} parent=5 // pred_fallthru
        _
      %p299 = scmp.le.s32.totalorder 2, %s13
      // Predicated region
      $region41: #{tpu_custom_call.1} parent=5 // pred_check
        %p300 = pneg %p299
      $region42: #{tpu_custom_call.1} parent=5 // pred_check_branch
        %302 = sbr.rel (%p300) target = $region44
      $region43: #{tpu_custom_call.1} parent=5 // pred_region
        %s303 = ssub.s32 %s13, 2
        // Predicated region
        $region45: #{tpu_custom_call.1} parent=43 // pred_check
          %p304 = pneg %p93
        $region46: #{tpu_custom_call.1} parent=43 // pred_check_branch
          %306 = sbr.rel (%p304) target = $region48
        $region47: #{tpu_custom_call.1} parent=43 // pred_region
          %s307 = sand.u32 %s78, 1
          %s308 = scalar_lea.sflag [#allocation5], %s307
          %s309 = sand.u32 %s78, 1
          %s310 = smul.addr %s309, 8
          %s311 = scalar_lea.vmem [#allocation6], %s310
          %313 = dma.done %s308, 128
        $region48: #{tpu_custom_call.1} parent=43 // pred_fallthru
          _
      $region44: #{tpu_custom_call.1} parent=5 // pred_fallthru
        _
    $region6: #{tpu_custom_call.1} parent=1 // loop_footer
      %s17 = sadd.s32 1, %s13
    $region7: #{tpu_custom_call.1} parent=1 // loop_footer_branch
      %12 = sbr.rel target = $region3
    $region8: #{tpu_custom_call.1} parent=1 // loop_exit
      _
    %314 = vsyncpa [#allocation4], 1
    %s315 = scalar_lea.sflag [#allocation4], 1
    %316 = vsyncpa %s315, 1
    %317 = vsyncpa [#allocation5], 1
    %s318 = scalar_lea.sflag [#allocation5], 1
    %319 = vsyncpa %s318, 1

</llo_original>
